<compile_context>
chip_gen: v7x
topology: tpu7x:2x2x1
jax: 0.10.0
libtpu: 0.0.40
codegen_flags: <defaults>
</compile_context>

<pallas_src>
import functools

import jax
import jax.numpy as jnp
from jax.experimental import pallas as pl
from jax.experimental.pallas import tpu as pltpu


def _round_up(x, m):
    return (x + m - 1) // m * m


def _mlp_eval_kernel(x_ref, w_ref, b_ref, o_ref, acc_ref):
    k = pl.program_id(2)

    @pl.when(k == 0)
    def _():
        acc_ref[...] = jnp.zeros_like(acc_ref)

    acc_ref[...] += jnp.dot(x_ref[...], w_ref[...],
                            preferred_element_type=jnp.float32)

    @pl.when(k == pl.num_programs(2) - 1)
    def _():
        y = acc_ref[...] + b_ref[...].astype(jnp.float32)
        o_ref[...] = jnp.maximum(y, 0.0).astype(o_ref.dtype)


def _mlp_train_kernel(x_ref, m_ref, w_ref, b_ref, o_ref, acc_ref, *, scale):
    k = pl.program_id(2)

    @pl.when(k == 0)
    def _():
        acc_ref[...] = jnp.zeros_like(acc_ref)

    # mask is {0, 1} in x's dtype -> one native-dtype multiply on the VPU.
    xd = x_ref[...] * m_ref[...]
    acc_ref[...] += jnp.dot(xd, w_ref[...],
                            preferred_element_type=jnp.float32)

    @pl.when(k == pl.num_programs(2) - 1)
    def _():
        # 1/(1-p) inverted-dropout scale folded into the epilogue.
        y = acc_ref[...] * scale + b_ref[...].astype(jnp.float32)
        o_ref[...] = jnp.maximum(y, 0.0).astype(o_ref.dtype)


def mlp_block(x, w, b, *, dropout_p=0.0, training=False, rng_key=None,
              tile_m=256, tile_n=256, tile_k=512):
    """Pallas MLPBlock forward.

    x: [..., in_channels]
    w: [in_channels, out_channels]   (transpose of PyTorch Linear.weight)
    b: [out_channels]
    """
    in_features, out_features = w.shape
    assert x.shape[-1] == in_features
    lead_shape = x.shape[:-1]
    x2 = x.reshape(-1, in_features)
    M, K, N = x2.shape[0], in_features, out_features

    # MXU/lane-aligned tiles, clamped to the (padded) problem size.
    tm = min(tile_m, _round_up(M, 8))
    tk = min(tile_k, _round_up(K, 128))
    tn = min(tile_n, _round_up(N, 128))
    Mp, Kp, Np = _round_up(M, tm), _round_up(K, tk), _round_up(N, tn)

    xp = x2 if (Mp, Kp) == (M, K) else jnp.pad(x2, ((0, Mp - M), (0, Kp - K)))
    wp = w if (Kp, Np) == (K, N) else jnp.pad(w, ((0, Kp - K), (0, Np - N)))
    bp = (b if Np == N else jnp.pad(b, (0, Np - N))).reshape(1, Np)

    grid = (Mp // tm, Np // tn, Kp // tk)
    x_spec = pl.BlockSpec((tm, tk), lambda i, j, k: (i, k))
    w_spec = pl.BlockSpec((tk, tn), lambda i, j, k: (k, j))
    b_spec = pl.BlockSpec((1, tn), lambda i, j, k: (0, j))
    o_spec = pl.BlockSpec((tm, tn), lambda i, j, k: (i, j))
    out_shape = jax.ShapeDtypeStruct((Mp, Np), x.dtype)
    scratch = [pltpu.VMEM((tm, tn), jnp.float32)]
    compiler_params = pltpu.CompilerParams(
        dimension_semantics=("parallel", "parallel", "arbitrary"),
        vmem_limit_bytes=64 * 1024 * 1024,
    )

    use_dropout = training and dropout_p > 0.0
    if use_dropout:
        assert dropout_p < 1.0, "dropout_p must be < 1"
        if rng_key is None:
            rng_key = jax.random.PRNGKey(0)
        keep = jax.random.bernoulli(rng_key, 1.0 - dropout_p, (M, K))
        mask = keep.astype(x.dtype)
        maskp = mask if (Mp, Kp) == (M, K) else jnp.pad(
            mask, ((0, Mp - M), (0, Kp - K)))

        kernel = functools.partial(
            _mlp_train_kernel, scale=float(1.0 / (1.0 - dropout_p)))
        in_specs = [x_spec, x_spec, w_spec, b_spec]
        operands = (xp, maskp, wp, bp)
        extra_bytes = maskp.size * maskp.dtype.itemsize
    else:
        kernel = _mlp_eval_kernel
        in_specs = [x_spec, w_spec, b_spec]
        operands = (xp, wp, bp)
        extra_bytes = 0

    cost = pl.CostEstimate(
        flops=2 * Mp * Kp * Np,
        transcendentals=0,
        bytes_accessed=(xp.size * xp.dtype.itemsize
                        + wp.size * wp.dtype.itemsize
                        + bp.size * bp.dtype.itemsize
                        + Mp * Np * jnp.dtype(x.dtype).itemsize
                        + extra_bytes),
    )

    out = pl.pallas_call(
        kernel,
        out_shape=out_shape,
        grid_spec=pltpu.PrefetchScalarGridSpec(
            num_scalar_prefetch=0,
            grid=grid,
            in_specs=in_specs,
            out_specs=o_spec,
            scratch_shapes=scratch,
        ),
        compiler_params=compiler_params,
        cost_estimate=cost,
    )(*operands)

    # Un-pad and restore the leading dims.
    out = out[:M, :N]
    return out.reshape(*lead_shape, out_features)


def _init_params(key, in_channels, out_channels):
    # Deterministic init mimicking nn.Linear's default (+/- 1/sqrt(fan_in)).
    kw, kb = jax.random.split(key)
    bound = 1.0 / jnp.sqrt(in_channels)
    w = jax.random.uniform(kw, (in_channels, out_channels), jnp.float32,
                           -bound, bound)
    b = jax.random.uniform(kb, (out_channels,), jnp.float32, -bound, bound)
    return w, b


if __name__ == "__main__":
    key = jax.random.PRNGKey(0)
    kx, kp, kd = jax.random.split(key, 3)

    batch, seq = 2, 8
    in_channels, out_channels = 32, 32
    dropout_p = 0.5

    x = jax.random.normal(kx, (batch, seq, in_channels), jnp.float32)
    w, b = _init_params(kp, in_channels, out_channels)

    # Eval-mode forward (dropout == identity): check against pure-JAX reference.
    y = mlp_block(x, w, b, dropout_p=dropout_p, training=False)
    y = jax.block_until_ready(y)
    y_ref = jnp.maximum(x.reshape(-1, in_channels) @ w + b, 0.0).reshape(
        batch, seq, out_channels)
    assert y.shape == (batch, seq, out_channels)
    assert jnp.allclose(y, y_ref, atol=1e-5, rtol=1e-5)

    # Train-mode forward (inverted dropout; mask drawn in the wrapper with the
    # same key, so the reference can reproduce it).
    y_train = mlp_block(x, w, b, dropout_p=dropout_p, training=True,
                        rng_key=kd)
    y_train = jax.block_until_ready(y_train)
    keep_ref = jax.random.bernoulli(
        kd, 1.0 - dropout_p, (batch * seq, in_channels)).astype(jnp.float32)
    x_drop = x.reshape(-1, in_channels) * keep_ref / (1.0 - dropout_p)
    y_train_ref = jnp.maximum(x_drop @ w + b, 0.0).reshape(
        batch, seq, out_channels)
    assert y_train.shape == (batch, seq, out_channels)
    assert jnp.allclose(y_train, y_train_ref, atol=1e-4, rtol=1e-4)

    print("KERNEL_OK")
</pallas_src>

<mosaic_0001>
module attributes {stable_mosaic.version = 11 : i64} {
  func.func @_mlp_eval_kernel(%arg0: i32, %arg1: i32, %arg2: i32, %arg3: memref<16x128xf32, #tpu.memory_space<vmem>>, %arg4: memref<128x128xf32, #tpu.memory_space<vmem>>, %arg5: memref<1x128xf32, #tpu.memory_space<vmem>>, %arg6: memref<16x128xf32, #tpu.memory_space<vmem>>, %arg7: memref<16x128xf32, #tpu.memory_space<vmem>>) attributes {dimension_semantics = [#tpu.dimension_semantics<parallel>, #tpu.dimension_semantics<parallel>, #tpu.dimension_semantics<arbitrary>], iteration_bounds = array<i64: 1, 1, 1>, scalar_prefetch = 0 : i64, scratch_operands = 1 : i64, tpu.core_type = #tpu.core_type<tc>, window_params = [{transform_indices = @transform_0, window_bounds = array<i64: 16, 128>}, {transform_indices = @transform_1, window_bounds = array<i64: 128, 128>}, {transform_indices = @transform_2, window_bounds = array<i64: 1, 128>}, {transform_indices = @transform_3, window_bounds = array<i64: 16, 128>}]} {
    %c0_i32 = arith.constant 0 : i32
    %0 = arith.cmpi eq, %arg2, %c0_i32 : i32
    %1 = arith.extui %0 : i1 to i32
    %c0_i32_0 = arith.constant 0 : i32
    %2 = arith.cmpi ne, %1, %c0_i32_0 : i32
    scf.if %2 {
      %cst_10 = arith.constant 0.000000e+00 : f32
      %12 = vector.broadcast %cst_10 : f32 to vector<16x128xf32>
      %c0_11 = arith.constant 0 : index
      %c0_12 = arith.constant 0 : index
      %13 = vector.load %arg7[%c0_11, %c0_12] : memref<16x128xf32, #tpu.memory_space<vmem>>, vector<16x128xf32>
      tpu.vector_store %arg7[%c0_11, %c0_12], %12 {strides = array<i32>} : memref<16x128xf32, #tpu.memory_space<vmem>>, vector<16x128xf32>,
    } else {
    }
    %c0 = arith.constant 0 : index
    %c0_1 = arith.constant 0 : index
    %3 = vector.load %arg7[%c0, %c0_1] : memref<16x128xf32, #tpu.memory_space<vmem>>, vector<16x128xf32>
    %c0_2 = arith.constant 0 : index
    %c0_3 = arith.constant 0 : index
    %4 = vector.load %arg3[%c0_2, %c0_3] : memref<16x128xf32, #tpu.memory_space<vmem>>, vector<16x128xf32>
    %c0_4 = arith.constant 0 : index
    %c0_5 = arith.constant 0 : index
    %5 = vector.load %arg4[%c0_4, %c0_5] : memref<128x128xf32, #tpu.memory_space<vmem>>, vector<128x128xf32>
    %cst = arith.constant dense<0.000000e+00> : vector<16x128xf32>
    %6 = tpu.matmul %4, %5, %cst {dimension_numbers = #tpu.dot_dimension_numbers<[1], [0], [0], [1], [0, 0, 1, 1], [], []>} : vector<16x128xf32>, vector<128x128xf32>, vector<16x128xf32> -> vector<16x128xf32>
    %7 = arith.addf %3, %6 : vector<16x128xf32>
    %c0_6 = arith.constant 0 : index
    %c0_7 = arith.constant 0 : index
    %8 = vector.load %arg7[%c0_6, %c0_7] : memref<16x128xf32, #tpu.memory_space<vmem>>, vector<16x128xf32>
    tpu.vector_store %arg7[%c0_6, %c0_7], %7 {strides = array<i32>} : memref<16x128xf32, #tpu.memory_space<vmem>>, vector<16x128xf32>,
    %c0_i32_8 = arith.constant 0 : i32
    %9 = arith.cmpi eq, %arg2, %c0_i32_8 : i32
    %10 = arith.extui %9 : i1 to i32
    %c0_i32_9 = arith.constant 0 : i32
    %11 = arith.cmpi ne, %10, %c0_i32_9 : i32
    scf.if %11 {
      %c0_10 = arith.constant 0 : index
      %c0_11 = arith.constant 0 : index
      %12 = vector.load %arg7[%c0_10, %c0_11] : memref<16x128xf32, #tpu.memory_space<vmem>>, vector<16x128xf32>
      %c0_12 = arith.constant 0 : index
      %c0_13 = arith.constant 0 : index
      %13 = vector.load %arg5[%c0_12, %c0_13] : memref<1x128xf32, #tpu.memory_space<vmem>>, vector<1x128xf32>
      %14 = vector.broadcast %13 : vector<1x128xf32> to vector<16x128xf32>
      %15 = arith.addf %12, %14 : vector<16x128xf32>
      %cst_14 = arith.constant 0.000000e+00 : f32
      %16 = vector.broadcast %cst_14 : f32 to vector<16x128xf32>
      %17 = arith.maximumf %15, %16 : vector<16x128xf32>
      %c0_15 = arith.constant 0 : index
      %c0_16 = arith.constant 0 : index
      %18 = vector.load %arg6[%c0_15, %c0_16] : memref<16x128xf32, #tpu.memory_space<vmem>>, vector<16x128xf32>
      tpu.vector_store %arg6[%c0_15, %c0_16], %17 {strides = array<i32>} : memref<16x128xf32, #tpu.memory_space<vmem>>, vector<16x128xf32>,
    } else {
    }
    return
  }
  func.func @transform_0(%arg0: i32, %arg1: i32, %arg2: i32) -> (i32, i32) {
    %c0_i32 = arith.constant 0 : i32
    return %arg0, %arg2 : i32, i32
  }
  func.func @transform_1(%arg0: i32, %arg1: i32, %arg2: i32) -> (i32, i32) {
    %c0_i32 = arith.constant 0 : i32
    return %arg2, %arg1 : i32, i32
  }
  func.func @transform_2(%arg0: i32, %arg1: i32, %arg2: i32) -> (i32, i32) {
    %c0_i32 = arith.constant 0 : i32
    %c0_i32_0 = arith.constant 0 : i32
    return %c0_i32, %arg1 : i32, i32
  }
  func.func @transform_3(%arg0: i32, %arg1: i32, %arg2: i32) -> (i32, i32) {
    %c0_i32 = arith.constant 0 : i32
    return %arg0, %arg1 : i32, i32
  }
}

</mosaic_0001>

<llo_original>
// kernel: tpu_custom_call.1
$region0: #{tpu_custom_call.1}
  #allocation0 [shape = 'u32[]', space=smem, size = 0x4, offset = 0x4, fixed_abs, tag = 'smem constant byte address 0x4 - core index']
  #allocation1 [shape = 'u32[144,128]{1,0:T(1,128)}', space=vmem, size = 0x12000, scoped, tag = 'internal scratch']
  #allocation2 [shape = 'f32[16,128]{1,0:T(8,128)}', space=vmem, size = 0x2000, scoped, tag = 'scratch operand']
  %s0 = inlined_call_operand.hbm [shape: f32[16,128], index: 0, kind: input, shape index: {}]
  %s1 = inlined_call_operand.hbm [shape: f32[128,128], index: 1, kind: input, shape index: {}]
  %s2 = inlined_call_operand.hbm [shape: f32[1,128], index: 2, kind: input, shape index: {}]
  %s3 = inlined_call_operand.hbm [shape: f32[16,128], index: 3, kind: output, shape index: {}]
  %s4 = sld [smem:[#allocation0]]
  $region42: #{tpu_custom_call.1} parent=0
    _
  %s6 = ssub.s32 1, %s4
  %s7 = scalar_select 0, %s6, %s4
  $region1: #{tpu_custom_call.1} parent=0
    #allocation3 [shape = 'u8[8192]{0}', space=vmem, size = 0x2000, scoped, tag = 'input window, operand 0, single buffered']
    #allocation4 [shape = 's32[1]{0}', space=sflag, size = 0x4, scoped, tag = 'scoped memory for tpu_custom_call.1']
    #allocation5 [shape = 's32[1]{0}', space=sflag, size = 0x4, scoped, tag = 'scoped memory for tpu_custom_call.1']
    #allocation6 [shape = 'u8[65536]{0}', space=vmem, size = 0x10000, scoped, tag = 'input window, operand 1, single buffered']
    #allocation7 [shape = 's32[1]{0}', space=sflag, size = 0x4, scoped, tag = 'scoped memory for tpu_custom_call.1']
    #allocation8 [shape = 'u8[512]{0}', space=vmem, size = 0x400, scoped, tag = 'input window, operand 2, single buffered']
    #allocation9 [shape = 'u8[8192]{0}', space=vmem, size = 0x2000, scoped, tag = 'output window, operand 0, single buffered']
    %8 = vsyncpa [#allocation4], 0
    %9 = vsyncpa [#allocation7], 0
    %10 = vsyncpa [#allocation5], 0
    // Predicated region
    $region2: #{tpu_custom_call.1} parent=1 // pred_check
      _
    $region3: #{tpu_custom_call.1} parent=1 // pred_check_branch
      %12 = sbr.rel (0) target = $region5
    $region4: #{tpu_custom_call.1} parent=1 // pred_region
      %s14 = ssub.s32 256, 256
      %15 = vsyncadd [#allocation4], %s14
      %s16 = sshll.u32 [#allocation3], 4
      %s17 = int_to_ptr.vmem [resolvable:$true] %s16
      %22 = dma.hbm_to_vmem [thread:$0]  %s0, 256, %s17, [#allocation4], 128, 128, 8
    $region5: #{tpu_custom_call.1} parent=1 // pred_fallthru
      _
    // Predicated region
    $region6: #{tpu_custom_call.1} parent=1 // pred_check
      _
    $region7: #{tpu_custom_call.1} parent=1 // pred_check_branch
      %24 = sbr.rel (0) target = $region9
    $region8: #{tpu_custom_call.1} parent=1 // pred_region
      %s26 = ssub.s32 2048, 2048
      %27 = vsyncadd [#allocation7], %s26
      %s28 = sshll.u32 [#allocation6], 4
      %s29 = int_to_ptr.vmem [resolvable:$true] %s28
      %34 = dma.hbm_to_vmem [thread:$0]  %s1, 2048, %s29, [#allocation7], 128, 128, 8
    $region9: #{tpu_custom_call.1} parent=1 // pred_fallthru
      _
    // Predicated region
    $region10: #{tpu_custom_call.1} parent=1 // pred_check
      _
    $region11: #{tpu_custom_call.1} parent=1 // pred_check_branch
      %36 = sbr.rel (0) target = $region13
    $region12: #{tpu_custom_call.1} parent=1 // pred_region
      %s38 = ssub.s32 16, 16
      %39 = vsyncadd [#allocation7], %s38
      %s41 = sshll.u32 [#allocation8], 4
      %s42 = int_to_ptr.vmem [resolvable:$true] %s41
      %44 = dma.hbm_to_vmem [thread:$0]  %s2, 16, %s42, [#allocation7]
    $region13: #{tpu_custom_call.1} parent=1 // pred_fallthru
      _
    // Predicated region
    $region14: #{tpu_custom_call.1} parent=1 // pred_check
      _
    $region15: #{tpu_custom_call.1} parent=1 // pred_check_branch
      %46 = sbr.rel (0) target = $region17
    $region16: #{tpu_custom_call.1} parent=1 // pred_region
      %47 = dma.done [#allocation4], 256
    $region17: #{tpu_custom_call.1} parent=1 // pred_fallthru
      _
    // Predicated region
    $region18: #{tpu_custom_call.1} parent=1 // pred_check
      _
    $region19: #{tpu_custom_call.1} parent=1 // pred_check_branch
      %49 = sbr.rel (0) target = $region21
    $region20: #{tpu_custom_call.1} parent=1 // pred_region
      %50 = dma.done [#allocation7], 2048
    $region21: #{tpu_custom_call.1} parent=1 // pred_fallthru
      _
    // Predicated region
    $region22: #{tpu_custom_call.1} parent=1 // pred_check
      _
    $region23: #{tpu_custom_call.1} parent=1 // pred_check_branch
      %52 = sbr.rel (0) target = $region25
    $region24: #{tpu_custom_call.1} parent=1 // pred_region
      %53 = dma.done [#allocation7], 16
    $region25: #{tpu_custom_call.1} parent=1 // pred_fallthru
      _
    %p54 = scmp.eq.s32.totalorder 0, 0
    // Predicated region
    $region26: #{tpu_custom_call.1} parent=1 // pred_check
      %p55 = pneg %p54
    $region27: #{tpu_custom_call.1} parent=1 // pred_check_branch
      %57 = sbr.rel (%p55) target = $region29
    $region28: #{tpu_custom_call.1} parent=1 // pred_region
      %58 = vst [vmem:[#allocation2] sm:$0xff] 0.0
      %59 = vst [vmem:[#allocation2 + $0x8] sm:$0xff] 0.0
    $region29: #{tpu_custom_call.1} parent=1 // pred_fallthru
      _
    %v60 = vld [vmem:[#allocation2] sm:$0xff]
    %v61 = vld [vmem:[#allocation2 + $0x8] sm:$0xff]
    %v62 = vld [vmem:[#allocation3] sm:$0xff]
    %v63 = vld [vmem:[#allocation3 + $0x8] sm:$0xff]
    %v64 = vld [vmem:[#allocation6] sm:$0xff]
    %v65 = vld [vmem:[#allocation6 + $0x8] sm:$0xff]
    %v66 = vld [vmem:[#allocation6 + $0x10] sm:$0xff]
    %v67 = vld [vmem:[#allocation6 + $0x18] sm:$0xff]
    %v68 = vld [vmem:[#allocation6 + $0x20] sm:$0xff]
    %v69 = vld [vmem:[#allocation6 + $0x28] sm:$0xff]
    %v70 = vld [vmem:[#allocation6 + $0x30] sm:$0xff]
    %v71 = vld [vmem:[#allocation6 + $0x38] sm:$0xff]
    %v72 = vld [vmem:[#allocation6 + $0x40] sm:$0xff]
    %v73 = vld [vmem:[#allocation6 + $0x48] sm:$0xff]
    %v74 = vld [vmem:[#allocation6 + $0x50] sm:$0xff]
    %v75 = vld [vmem:[#allocation6 + $0x58] sm:$0xff]
    %v76 = vld [vmem:[#allocation6 + $0x60] sm:$0xff]
    %v77 = vld [vmem:[#allocation6 + $0x68] sm:$0xff]
    %v78 = vld [vmem:[#allocation6 + $0x70] sm:$0xff]
    %v79 = vld [vmem:[#allocation6 + $0x78] sm:$0xff]
    %80 = vmatprep.subr.mxu0 0.0
    %81 = vmatpush1.msra.mxu0 %v64
    %82 = vmatprep.subr.mxu0 0.0
    %83 = vmatpush1.msra.mxu0 %v65
    %84 = vmatprep.subr.mxu0 0.0
    %85 = vmatpush1.msra.mxu0 %v66
    %86 = vmatprep.subr.mxu0 0.0
    %87 = vmatpush1.msra.mxu0 %v67
    %88 = vmatprep.subr.mxu0 0.0
    %89 = vmatpush1.msra.mxu0 %v68
    %90 = vmatprep.subr.mxu0 0.0
    %91 = vmatpush1.msra.mxu0 %v69
    %92 = vmatprep.subr.mxu0 0.0
    %93 = vmatpush1.msra.mxu0 %v70
    %94 = vmatprep.subr.mxu0 0.0
    %95 = vmatpush1.msra.mxu0 %v71
    %96 = vmatprep.subr.mxu0 0.0
    %97 = vmatpush1.msra.mxu0 %v72
    %98 = vmatprep.subr.mxu0 0.0
    %99 = vmatpush1.msra.mxu0 %v73
    %100 = vmatprep.subr.mxu0 0.0
    %101 = vmatpush1.msra.mxu0 %v74
    %102 = vmatprep.subr.mxu0 0.0
    %103 = vmatpush1.msra.mxu0 %v75
    %104 = vmatprep.subr.mxu0 0.0
    %105 = vmatpush1.msra.mxu0 %v76
    %106 = vmatprep.subr.mxu0 0.0
    %107 = vmatpush1.msra.mxu0 %v77
    %108 = vmatprep.subr.mxu0 0.0
    %109 = vmatpush1.msra.mxu0 %v78
    %110 = vmatprep.subr.mxu0 0.0
    %111 = vmatpush1.msra.mxu0 %v79
    %112 = vmatprep.subr.mxu0 0.0
    %113 = vmatpush1.msra.mxu0 0.0
    %114 = vmatprep.subr.mxu0 0.0
    %115 = vmatpush1.msra.mxu0 0.0
    %116 = vmatprep.subr.mxu0 0.0
    %117 = vmatpush1.msra.mxu0 0.0
    %118 = vmatprep.subr.mxu0 0.0
    %119 = vmatpush1.msra.mxu0 0.0
    %120 = vmatprep.subr.mxu0 0.0
    %121 = vmatpush1.msra.mxu0 0.0
    %122 = vmatprep.subr.mxu0 0.0
    %123 = vmatpush1.msra.mxu0 0.0
    %124 = vmatprep.subr.mxu0 0.0
    %125 = vmatpush1.msra.mxu0 0.0
    %126 = vmatprep.subr.mxu0 0.0
    %127 = vmatpush1.msra.mxu0 0.0
    %128 = vmatprep.subr.mxu0 0.0
    %129 = vmatpush1.msra.mxu0 0.0
    %130 = vmatprep.subr.mxu0 0.0
    %131 = vmatpush1.msra.mxu0 0.0
    %132 = vmatprep.subr.mxu0 0.0
    %133 = vmatpush1.msra.mxu0 0.0
    %134 = vmatprep.subr.mxu0 0.0
    %135 = vmatpush1.msra.mxu0 0.0
    %136 = vmatprep.subr.mxu0 0.0
    %137 = vmatpush1.msra.mxu0 0.0
    %138 = vmatprep.subr.mxu0 0.0
    %139 = vmatpush1.msra.mxu0 0.0
    %140 = vmatprep.subr.mxu0 0.0
    %141 = vmatpush1.msra.mxu0 0.0
    %142 = vmatprep.subr.mxu0 0.0
    %143 = vmatpush1.msra.mxu0 0.0
    %144 = vmatprep.mubr.f32.mxu0 0.0
    %145 = vmatmul.mubr.f32.gmra.mrb[0].mxu0 %v62
    %v146 = vpop.f32.mrb[0].mxu0
    %v147 = vadd.f32 0.0, %v146
    %v148 = vpop.f32.mrb[0].mxu0
    %149 = vmatprep.mubr.f32.mxu0 0.0
    %150 = vmatmul.mubr.f32.gmra.mrb[0].mxu0 %v63
    %v151 = vpop.f32.mrb[0].mxu0
    %v152 = vadd.f32 0.0, %v151
    %v153 = vpop.f32.mrb[0].mxu0
    %154 = vdwg.mxu0
    %v155 = vadd.f32 %v60, %v147
    %v156 = vadd.f32 %v61, %v152
    %157 = vst [vmem:[#allocation2] sm:$0xff] %v155
    %158 = vst [vmem:[#allocation2 + $0x8] sm:$0xff] %v156
    // Predicated region
    $region30: #{tpu_custom_call.1} parent=1 // pred_check
      %p159 = pneg %p54
    $region31: #{tpu_custom_call.1} parent=1 // pred_check_branch
      %161 = sbr.rel (%p159) target = $region33
    $region32: #{tpu_custom_call.1} parent=1 // pred_region
      %v162 = vld [vmem:[#allocation2] sm:$0xff]
      %v163 = vld [vmem:[#allocation2 + $0x8] sm:$0xff]
      %v164 = vld [vmem:[#allocation8] sm:$0x1]
      %v166 = vlaneseq
      %v167 = vshrl.u32 %v166, 7
      %v168 = vsub.s32 0, %v167
      %v169 = vrot.slane %v164, %v168
      %v171 = vadd.f32 %v162, %v169
      %v172 = vadd.f32 %v163, %v169
      %v173 = vmax.f32 %v171, 0.0
      %v174 = vmax.f32 %v172, 0.0
      %175 = vst [vmem:[#allocation9] sm:$0xff] %v173
      %176 = vst [vmem:[#allocation9 + $0x8] sm:$0xff] %v174
    $region33: #{tpu_custom_call.1} parent=1 // pred_fallthru
      _
    // Predicated region
    $region34: #{tpu_custom_call.1} parent=1 // pred_check
      _
    $region35: #{tpu_custom_call.1} parent=1 // pred_check_branch
      %178 = sbr.rel (0) target = $region37
    $region36: #{tpu_custom_call.1} parent=1 // pred_region
      %s180 = ssub.s32 256, 256
      %181 = vsyncadd [#allocation5], %s180
      %s182 = sshll.u32 [#allocation9], 4
      %s183 = int_to_ptr.vmem [resolvable:$true] %s182
      %188 = dma.vmem_to_hbm [thread:$0]  %s183, 256, %s3, [#allocation5], 128, 128, 8
    $region37: #{tpu_custom_call.1} parent=1 // pred_fallthru
      _
    // Predicated region
    $region38: #{tpu_custom_call.1} parent=1 // pred_check
      _
    $region39: #{tpu_custom_call.1} parent=1 // pred_check_branch
      %190 = sbr.rel (0) target = $region41
    $region40: #{tpu_custom_call.1} parent=1 // pred_region
      %191 = dma.done [#allocation5], 256
    $region41: #{tpu_custom_call.1} parent=1 // pred_fallthru
      _
    %192 = vsyncpa [#allocation4], 1
    %193 = vsyncpa [#allocation7], 1
    %194 = vsyncpa [#allocation5], 1

</llo_original>
